<compile_context>
chip_gen: v7x
topology: tpu7x:2x2x1
jax: 0.10.0
libtpu: 0.0.40
codegen_flags: <defaults>
</compile_context>

<pallas_src>
from functools import partial

import jax
import jax.numpy as jnp
from jax.experimental import pallas as pl
from jax.experimental.pallas import tpu as pltpu

_NUM_CORES = 2          # v7x dual TensorCore; costs only one extra cheap grid step on v5e/v6e
_VMEM_BUDGET = 24 << 20  # bytes reserved for the 3 double-buffered input tiles


def _vfl_kernel(pred_ref, gt_ref, label_ref, out_ref, *, alpha, gamma):
    """Elementwise varifocal term; accumulates into a resident (8, C_pad) output block."""
    i = pl.program_id(1)  # reduction ("arbitrary") axis

    @pl.when(i == 0)
    def _():
        out_ref[...] = jnp.zeros_like(out_ref)

    x = pred_ref[...].astype(jnp.float32)    # logits
    z = gt_ref[...].astype(jnp.float32)      # targets (gt_score)
    lbl = label_ref[...].astype(jnp.float32)

    # One shared transcendental: e = exp(-|x|) feeds both sigmoid and log1p.
    e = jnp.exp(-jnp.abs(x))
    inv = 1.0 / (1.0 + e)
    sig = jnp.where(x >= 0.0, 1.0, e) * inv            # numerically stable sigmoid

    # sigmoid(x)^gamma: specialize small integer gamma to repeated multiplies (VPU only).
    if float(gamma) == float(int(gamma)) and 1 <= int(gamma) <= 4:
        pw = sig
        for _ in range(int(gamma) - 1):
            pw = pw * sig
    else:
        pw = jnp.power(sig, gamma)

    weight = alpha * pw * (1.0 - lbl) + z * lbl
    # Stable BCE-with-logits: max(x,0) - x*z + log1p(exp(-|x|))
    bce = jnp.maximum(x, 0.0) - x * z + jnp.log1p(e)

    contrib = bce * weight                              # (tile_rows, C_pad)
    r, c = contrib.shape
    # Fold rows onto the (8, C_pad) accumulator with pure VPU adds; no per-step XLU reduce.
    out_ref[...] += contrib.reshape(r // 8, 8, c).sum(axis=0)


def varifocal_loss(pred_score, gt_score, label, alpha=0.75, gamma=2.0, tile_rows=1024):
    """Compute Varifocal loss with a Pallas TPU kernel. Returns a float32 scalar."""
    assert pred_score.shape == gt_score.shape == label.shape
    C = pred_score.shape[-1]
    pred2d = pred_score.reshape(-1, C)
    gt2d = gt_score.reshape(-1, C)
    lbl2d = label.reshape(-1, C)
    R = pred2d.shape[0]

    # Lane-pad classes to a multiple of 128.
    C_pad = max(128, ((C + 127) // 128) * 128)

    # Row-tile: as large as the input allows, but clamped to a VMEM budget
    # (3 inputs x 2 pipeline buffers x tile bytes) so wide class dims still fit.
    itemsize = jnp.dtype(pred2d.dtype).itemsize
    budget_rows = _VMEM_BUDGET // (6 * C_pad * itemsize)
    budget_rows = max(8, (budget_rows // 8) * 8)
    tile_rows = max(8, min(int(tile_rows), ((R + 7) // 8) * 8, budget_rows))
    tile_rows = ((tile_rows + 7) // 8) * 8

    chunk = _NUM_CORES * tile_rows
    R_pad = ((R + chunk - 1) // chunk) * chunk
    steps = R_pad // chunk

    # Padded elements contribute exactly 0 to the sum:
    #   pred pad = -1e4 -> exp(-|x|) = 0, sigmoid = 0, max(x,0) = 0
    #   gt / label pad = 0 -> weight = 0 and bce = 0, so bce * weight = 0.
    if R_pad != R or C_pad != C:
        pred2d = jnp.pad(pred2d, ((0, R_pad - R), (0, C_pad - C)),
                         constant_values=-1e4)
        gt2d = jnp.pad(gt2d, ((0, R_pad - R), (0, C_pad - C)))
        lbl2d = jnp.pad(lbl2d, ((0, R_pad - R), (0, C_pad - C)))

    in_spec = pl.BlockSpec((tile_rows, C_pad), lambda p, i: (p * steps + i, 0))
    out_spec = pl.BlockSpec((8, C_pad), lambda p, i: (p, 0))  # resident per-core accumulator

    kernel = partial(_vfl_kernel, alpha=float(alpha), gamma=float(gamma))

    partial_sums = pl.pallas_call(
        kernel,
        out_shape=jax.ShapeDtypeStruct((_NUM_CORES * 8, C_pad), jnp.float32),
        grid_spec=pltpu.PrefetchScalarGridSpec(
            num_scalar_prefetch=0,
            grid=(_NUM_CORES, steps),
            in_specs=[in_spec, in_spec, in_spec],
            out_specs=out_spec,
        ),
        compiler_params=pltpu.CompilerParams(
            dimension_semantics=("parallel", "arbitrary"),
            vmem_limit_bytes=64 << 20),
    )(pred2d, gt2d, lbl2d)

    # Single tiny cross-lane/sublane collapse, done once outside the kernel.
    return jnp.sum(partial_sums)


def varifocal_loss_ref(pred_score, gt_score, label, alpha=0.75, gamma=2.0):
    """Pure-JAX reference matching the PyTorch forward."""
    x = pred_score.astype(jnp.float32)
    z = gt_score.astype(jnp.float32)
    lbl = label.astype(jnp.float32)
    weight = alpha * jnp.power(jax.nn.sigmoid(x), gamma) * (1.0 - lbl) + z * lbl
    bce = jnp.maximum(x, 0.0) - x * z + jnp.log1p(jnp.exp(-jnp.abs(x)))
    return jnp.sum(bce * weight)


if __name__ == "__main__":
    # VarifocalLoss has no parameters; only runtime inputs.
    # Shapes: (batch=2, anchors=32, classes=128) -> flattened to (64, 128) rows.
    B, A, C = 2, 32, 128
    key = jax.random.PRNGKey(0)
    k1, k2, k3 = jax.random.split(key, 3)

    pred_score = jax.random.normal(k1, (B, A, C), dtype=jnp.float32) * 2.0
    gt_score = jax.nn.sigmoid(jax.random.normal(k2, (B, A, C), dtype=jnp.float32))
    # binary label mask (0/1), like one-hot targets in YOLO assignment
    label = (jax.random.uniform(k3, (B, A, C)) > 0.9).astype(jnp.float32)

    loss = varifocal_loss(pred_score, gt_score, label)
    loss = jax.block_until_ready(loss)

    ref = varifocal_loss_ref(pred_score, gt_score, label)
    assert jnp.allclose(loss, ref, rtol=1e-5, atol=1e-4), (loss, ref)

    print("KERNEL_OK")
</pallas_src>

<mosaic_0001>
module attributes {stable_mosaic.version = 11 : i64} {
  func.func @_vfl_kernel(%arg0: i32, %arg1: i32, %arg2: memref<64x128xf32, #tpu.memory_space<vmem>>, %arg3: memref<64x128xf32, #tpu.memory_space<vmem>>, %arg4: memref<64x128xf32, #tpu.memory_space<vmem>>, %arg5: memref<8x128xf32, #tpu.memory_space<vmem>>) attributes {dimension_semantics = [#tpu.dimension_semantics<parallel>, #tpu.dimension_semantics<arbitrary>], iteration_bounds = array<i64: 2, 1>, scalar_prefetch = 0 : i64, scratch_operands = 0 : i64, tpu.core_type = #tpu.core_type<tc>, window_params = [{transform_indices = @transform_0, window_bounds = array<i64: 64, 128>}, {transform_indices = @transform_1, window_bounds = array<i64: 64, 128>}, {transform_indices = @transform_2, window_bounds = array<i64: 64, 128>}, {transform_indices = @transform_3, window_bounds = array<i64: 8, 128>}]} {
    %c0_i32 = arith.constant 0 : i32
    %0 = arith.cmpi eq, %arg1, %c0_i32 : i32
    %1 = arith.extui %0 : i1 to i32
    %c0_i32_0 = arith.constant 0 : i32
    %2 = arith.cmpi ne, %1, %c0_i32_0 : i32
    scf.if %2 {
      %cst_18 = arith.constant 0.000000e+00 : f32
      %39 = vector.broadcast %cst_18 : f32 to vector<8x128xf32>
      %c0_19 = arith.constant 0 : index
      %c0_20 = arith.constant 0 : index
      %40 = vector.load %arg5[%c0_19, %c0_20] : memref<8x128xf32, #tpu.memory_space<vmem>>, vector<8x128xf32>
      tpu.vector_store %arg5[%c0_19, %c0_20], %39 {strides = array<i32>} : memref<8x128xf32, #tpu.memory_space<vmem>>, vector<8x128xf32>,
    } else {
    }
    %c0 = arith.constant 0 : index
    %c0_1 = arith.constant 0 : index
    %3 = vector.load %arg2[%c0, %c0_1] : memref<64x128xf32, #tpu.memory_space<vmem>>, vector<64x128xf32>
    %c0_2 = arith.constant 0 : index
    %c0_3 = arith.constant 0 : index
    %4 = vector.load %arg3[%c0_2, %c0_3] : memref<64x128xf32, #tpu.memory_space<vmem>>, vector<64x128xf32>
    %c0_4 = arith.constant 0 : index
    %c0_5 = arith.constant 0 : index
    %5 = vector.load %arg4[%c0_4, %c0_5] : memref<64x128xf32, #tpu.memory_space<vmem>>, vector<64x128xf32>
    %6 = math.absf %3 : vector<64x128xf32>
    %cst = arith.constant 0.000000e+00 : f32
    %7 = vector.broadcast %cst : f32 to vector<64x128xf32>
    %8 = arith.subf %7, %6 : vector<64x128xf32>
    %9 = math.exp %8 : vector<64x128xf32>
    %cst_6 = arith.constant 1.000000e+00 : f32
    %10 = vector.broadcast %cst_6 : f32 to vector<64x128xf32>
    %11 = arith.addf %10, %9 : vector<64x128xf32>
    %cst_7 = arith.constant 1.000000e+00 : f32
    %12 = vector.broadcast %cst_7 : f32 to vector<64x128xf32>
    %13 = arith.divf %12, %11 : vector<64x128xf32>
    %cst_8 = arith.constant 0.000000e+00 : f32
    %14 = vector.broadcast %cst_8 : f32 to vector<64x128xf32>
    %15 = arith.cmpf oge, %3, %14 : vector<64x128xf32>
    %cst_9 = arith.constant 1.000000e+00 : f32
    %16 = vector.broadcast %cst_9 : f32 to vector<64x128xf32>
    %17 = arith.select %15, %16, %9 : vector<64x128xi1>, vector<64x128xf32>
    %18 = arith.mulf %17, %13 : vector<64x128xf32>
    %19 = arith.mulf %18, %18 : vector<64x128xf32>
    %cst_10 = arith.constant 7.500000e-01 : f32
    %20 = vector.broadcast %cst_10 : f32 to vector<64x128xf32>
    %21 = arith.mulf %20, %19 : vector<64x128xf32>
    %cst_11 = arith.constant 1.000000e+00 : f32
    %22 = vector.broadcast %cst_11 : f32 to vector<64x128xf32>
    %23 = arith.subf %22, %5 : vector<64x128xf32>
    %24 = arith.mulf %21, %23 : vector<64x128xf32>
    %25 = arith.mulf %4, %5 : vector<64x128xf32>
    %26 = arith.addf %24, %25 : vector<64x128xf32>
    %cst_12 = arith.constant 0.000000e+00 : f32
    %27 = vector.broadcast %cst_12 : f32 to vector<64x128xf32>
    %28 = arith.maximumf %3, %27 : vector<64x128xf32>
    %29 = arith.mulf %3, %4 : vector<64x128xf32>
    %30 = arith.subf %28, %29 : vector<64x128xf32>
    %31 = math.log1p %9 : vector<64x128xf32>
    %32 = arith.addf %30, %31 : vector<64x128xf32>
    %33 = arith.mulf %32, %26 : vector<64x128xf32>
    %c0_13 = arith.constant 0 : index
    %c0_14 = arith.constant 0 : index
    %34 = vector.load %arg5[%c0_13, %c0_14] : memref<8x128xf32, #tpu.memory_space<vmem>>, vector<8x128xf32>
    %35 = vector.shape_cast %33 : vector<64x128xf32> to vector<8x8x128xf32>
    %cst_15 = arith.constant dense<0.000000e+00> : vector<8x128xf32>
    %36 = vector.multi_reduction <add>, %35, %cst_15 [0] : vector<8x8x128xf32> to vector<8x128xf32>
    %37 = arith.addf %34, %36 : vector<8x128xf32>
    %c0_16 = arith.constant 0 : index
    %c0_17 = arith.constant 0 : index
    %38 = vector.load %arg5[%c0_16, %c0_17] : memref<8x128xf32, #tpu.memory_space<vmem>>, vector<8x128xf32>
    tpu.vector_store %arg5[%c0_16, %c0_17], %37 {strides = array<i32>} : memref<8x128xf32, #tpu.memory_space<vmem>>, vector<8x128xf32>,
    return
  }
  func.func @transform_0(%arg0: i32, %arg1: i32) -> (i32, i32) {
    %c1_i32 = arith.constant 1 : i32
    %0 = arith.muli %arg0, %c1_i32 : i32
    %1 = arith.addi %0, %arg1 : i32
    %c0_i32 = arith.constant 0 : i32
    %c0_i32_0 = arith.constant 0 : i32
    return %1, %c0_i32 : i32, i32
  }
  func.func @transform_1(%arg0: i32, %arg1: i32) -> (i32, i32) {
    %c1_i32 = arith.constant 1 : i32
    %0 = arith.muli %arg0, %c1_i32 : i32
    %1 = arith.addi %0, %arg1 : i32
    %c0_i32 = arith.constant 0 : i32
    %c0_i32_0 = arith.constant 0 : i32
    return %1, %c0_i32 : i32, i32
  }
  func.func @transform_2(%arg0: i32, %arg1: i32) -> (i32, i32) {
    %c1_i32 = arith.constant 1 : i32
    %0 = arith.muli %arg0, %c1_i32 : i32
    %1 = arith.addi %0, %arg1 : i32
    %c0_i32 = arith.constant 0 : i32
    %c0_i32_0 = arith.constant 0 : i32
    return %1, %c0_i32 : i32, i32
  }
  func.func @transform_3(%arg0: i32, %arg1: i32) -> (i32, i32) {
    %c0_i32 = arith.constant 0 : i32
    %c0_i32_0 = arith.constant 0 : i32
    return %arg0, %c0_i32 : i32, i32
  }
}

</mosaic_0001>

<llo_original>
// kernel: tpu_custom_call.1
$region0: #{tpu_custom_call.1}
  #allocation0 [shape = 'u32[]', space=smem, size = 0x4, offset = 0x4, fixed_abs, tag = 'smem constant byte address 0x4 - core index']
  #allocation1 [shape = 'u32[144,128]{1,0:T(1,128)}', space=vmem, size = 0x12000, scoped, tag = 'internal scratch']
  %s0 = inlined_call_operand.hbm [shape: f32[128,128], index: 0, kind: input, shape index: {}]
  %s1 = inlined_call_operand.hbm [shape: f32[128,128], index: 1, kind: input, shape index: {}]
  %s2 = inlined_call_operand.hbm [shape: f32[128,128], index: 2, kind: input, shape index: {}]
  %s3 = inlined_call_operand.hbm [shape: f32[16,128], index: 3, kind: output, shape index: {}]
  %s4 = sld [smem:[#allocation0]]
  $region61: #{tpu_custom_call.1} parent=0
    _
  %s6 = ssub.s32 1, %s4
  %s7 = scalar_select 0, %s6, %s4
  $region1: #{tpu_custom_call.1} parent=0
    #allocation2 [shape = 'u8[65536]{0}', space=vmem, size = 0x10000, scoped, tag = 'input window, operand 0']
    #allocation3 [shape = 's32[2]{0}', space=sflag, size = 0x8, scoped, tag = 'scoped memory for tpu_custom_call.1']
    #allocation4 [shape = 's32[2]{0}', space=sflag, size = 0x8, scoped, tag = 'scoped memory for tpu_custom_call.1']
    #allocation5 [shape = 'u8[65536]{0}', space=vmem, size = 0x10000, scoped, tag = 'input window, operand 1']
    #allocation6 [shape = 's32[2]{0}', space=sflag, size = 0x8, scoped, tag = 'scoped memory for tpu_custom_call.1']
    #allocation7 [shape = 'u8[65536]{0}', space=vmem, size = 0x10000, scoped, tag = 'input window, operand 2']
    #allocation8 [shape = 'u8[8192]{0}', space=vmem, size = 0x2000, scoped, tag = 'output window, operand 0']
    %8 = vsyncpa [#allocation3], 0
    %s9 = scalar_lea.sflag [#allocation3], 1
    %10 = vsyncpa %s9, 0
    %11 = vsyncpa [#allocation6], 0
    %s12 = scalar_lea.sflag [#allocation6], 1
    %13 = vsyncpa %s12, 0
    %14 = vsyncpa [#allocation4], 0
    %s15 = scalar_lea.sflag [#allocation4], 1
    %16 = vsyncpa %s15, 0
    loop: start=0, step=1, limit=4
    $region2: #{tpu_custom_call.1} parent=1 // loop_pre_header
      _
    $region3: #{tpu_custom_call.1} parent=1 // loop_header
      %s18 = sphi 0, %s22
      %p19 = scmp.ge.s32.totalorder %s18, 4
      %s25 = sphi 0, %s37
      %s26 = sphi 0, %s33
      %s27 = sphi 0, %s25
      %s28 = sphi 0, %s26
      %s29 = sphi 0, %s27
      %s30 = sphi 0, %s28
      %s42 = sphi 0, %s44
      %s45 = sphi 0, %s42
      %s46 = sphi 0, %s45
      %s62 = sphi 0, %s46
      %s70 = sphi 0, %s72
      %s73 = sphi 0, %s70
      %s74 = sphi 0, %s73
      %s90 = sphi 0, %s74
      %s98 = sphi 0, %s100
      %s101 = sphi 0, %s98
      %s102 = sphi 0, %s101
      %s118 = sphi 0, %s102
      %s124 = sphi 0, %s126
      %s127 = sphi 0, %s124
      %s128 = sphi 0, %s127
      %s144 = sphi 0, %s128
    $region4: #{tpu_custom_call.1} parent=1 // loop_header_branch
      %21 = sbr.rel (%p19) target = $region8
    $region5: #{tpu_custom_call.1} parent=1 // loop_body
      %s23 = ssub.s32 %s18, 1
      %s24 = ssub.s32 %s18, 2
      %s31 = sadd.s32 1, %s26
      %p32 = scmp.ge.s32.totalorder %s31, 1
      %s33 = scalar_select %p32, 0, %s31
      %s34 = sadd.s32 1, %s25
      %s35 = scalar_select %p32, %s34, %s25
      %p36 = scmp.ge.s32.totalorder %s35, 2
      %s37 = scalar_select %p36, 0, %s35
      %s38 = sadd.s32 %s25, %s26
      %s39 = sadd.s32 %s37, %s33
      %s40 = ssub.s32 %s38, %s39
      %p41 = scmp.eq.s32.totalorder %s40, 0
      %s43 = sadd.s32 %s42, 1
      %s44 = scalar_select %p41, %s42, %s43
      %p47 = pneg %p41
      %p48 = scmp.eq.s32.totalorder %s18, 1
      %p49 = por %p47, %p48
      %p50 = scmp.ne.s32.totalorder %s42, %s45
      %p51 = scmp.eq.s32.totalorder %s18, 0
      %p52 = por %p50, %p51
      %p53 = scmp.ne.s32.totalorder %s42, %s45
      %p54 = scmp.eq.s32.totalorder %s23, 1
      %p55 = por %p53, %p54
      %p56 = scmp.ne.s32.totalorder %s45, %s46
      %p57 = scmp.eq.s32.totalorder %s23, 0
      %p58 = por %p56, %p57
      %p59 = scmp.ne.s32.totalorder %s45, %s46
      %p60 = scmp.eq.s32.totalorder %s24, 1
      %p61 = por %p59, %p60
      %p63 = scmp.ne.s32.totalorder %s46, %s62
      %p64 = scmp.eq.s32.totalorder %s24, 0
      %p65 = por %p63, %p64
      %s66 = sadd.s32 %s25, %s26
      %s67 = sadd.s32 %s37, %s33
      %s68 = ssub.s32 %s66, %s67
      %p69 = scmp.eq.s32.totalorder %s68, 0
      %s71 = sadd.s32 %s70, 1
      %s72 = scalar_select %p69, %s70, %s71
      %p75 = pneg %p69
      %p76 = scmp.eq.s32.totalorder %s18, 1
      %p77 = por %p75, %p76
      %p78 = scmp.ne.s32.totalorder %s70, %s73
      %p79 = scmp.eq.s32.totalorder %s18, 0
      %p80 = por %p78, %p79
      %p81 = scmp.ne.s32.totalorder %s70, %s73
      %p82 = scmp.eq.s32.totalorder %s23, 1
      %p83 = por %p81, %p82
      %p84 = scmp.ne.s32.totalorder %s73, %s74
      %p85 = scmp.eq.s32.totalorder %s23, 0
      %p86 = por %p84, %p85
      %p87 = scmp.ne.s32.totalorder %s73, %s74
      %p88 = scmp.eq.s32.totalorder %s24, 1
      %p89 = por %p87, %p88
      %p91 = scmp.ne.s32.totalorder %s74, %s90
      %p92 = scmp.eq.s32.totalorder %s24, 0
      %p93 = por %p91, %p92
      %s94 = sadd.s32 %s25, %s26
      %s95 = sadd.s32 %s37, %s33
      %s96 = ssub.s32 %s94, %s95
      %p97 = scmp.eq.s32.totalorder %s96, 0
      %s99 = sadd.s32 %s98, 1
      %s100 = scalar_select %p97, %s98, %s99
      %p103 = pneg %p97
      %p104 = scmp.eq.s32.totalorder %s18, 1
      %p105 = por %p103, %p104
      %p106 = scmp.ne.s32.totalorder %s98, %s101
      %p107 = scmp.eq.s32.totalorder %s18, 0
      %p108 = por %p106, %p107
      %p109 = scmp.ne.s32.totalorder %s98, %s101
      %p110 = scmp.eq.s32.totalorder %s23, 1
      %p111 = por %p109, %p110
      %p112 = scmp.ne.s32.totalorder %s101, %s102
      %p113 = scmp.eq.s32.totalorder %s23, 0
      %p114 = por %p112, %p113
      %p115 = scmp.ne.s32.totalorder %s101, %s102
      %p116 = scmp.eq.s32.totalorder %s24, 1
      %p117 = por %p115, %p116
      %p119 = scmp.ne.s32.totalorder %s102, %s118
      %p120 = scmp.eq.s32.totalorder %s24, 0
      %p121 = por %p119, %p120
      %s122 = ssub.s32 %s25, %s37
      %p123 = scmp.eq.s32.totalorder %s122, 0
      %s125 = sadd.s32 %s124, 1
      %s126 = scalar_select %p123, %s124, %s125
      %p129 = pneg %p123
      %p130 = scmp.eq.s32.totalorder %s18, 1
      %p131 = por %p129, %p130
      %p132 = scmp.ne.s32.totalorder %s124, %s127
      %p133 = scmp.eq.s32.totalorder %s18, 0
      %p134 = por %p132, %p133
      %p135 = scmp.ne.s32.totalorder %s124, %s127
      %p136 = scmp.eq.s32.totalorder %s23, 1
      %p137 = por %p135, %p136
      %p138 = scmp.ne.s32.totalorder %s127, %s128
      %p139 = scmp.eq.s32.totalorder %s23, 0
      %p140 = por %p138, %p139
      %p141 = scmp.ne.s32.totalorder %s127, %s128
      %p142 = scmp.eq.s32.totalorder %s24, 1
      %p143 = por %p141, %p142
      %p145 = scmp.ne.s32.totalorder %s128, %s144
      %p146 = scmp.eq.s32.totalorder %s24, 0
      %p147 = por %p145, %p146
      %p148 = scmp.le.s32.totalorder 1, %s18
      %p149 = scmp.lt.s32.totalorder %s18, 3
      %p150 = pnand %p148, %p149
      %p151 = pneg %p150
      // Predicated region
      $region9: #{tpu_custom_call.1} parent=5 // pred_check
        _
      $region10: #{tpu_custom_call.1} parent=5 // pred_check_branch
        %153 = sbr.rel (%p150) target = $region12
      $region11: #{tpu_custom_call.1} parent=5 // pred_region
        %s154 = ssub.s32 %s18, 1
      $region12: #{tpu_custom_call.1} parent=5 // pred_fallthru
        _
      %p155 = scmp.lt.s32.totalorder %s18, 2
      // Predicated region
      $region13: #{tpu_custom_call.1} parent=5 // pred_check
        %p156 = pneg %p155
      $region14: #{tpu_custom_call.1} parent=5 // pred_check_branch
        %158 = sbr.rel (%p156) target = $region16
      $region15: #{tpu_custom_call.1} parent=5 // pred_region
        // Predicated region
        $region17: #{tpu_custom_call.1} parent=15 // pred_check
          %p159 = pneg %p52
        $region18: #{tpu_custom_call.1} parent=15 // pred_check_branch
          %161 = sbr.rel (%p159) target = $region20
        $region19: #{tpu_custom_call.1} parent=15 // pred_region
          %s162 = sand.u32 %s42, 1
          %s163 = scalar_lea.sflag [#allocation3], %s162
          %s164 = sand.u32 %s42, 1
          %s165 = smul.addr %s164, 64
          %s166 = scalar_lea.vmem [#allocation2], %s165
          %s167 = sadd.s32 %s25, %s26
          %s168 = smul.u32 8, %s167
          %s170 = ssub.s32 1024, 1024
          %171 = vsyncadd %s163, %s170
          %s172 = smul.addr %s168, 128
          %s173 = scalar_lea.hbm %s0, %s172
          %s174 = sshll.u32 %s166, 4
          %s175 = int_to_ptr.vmem [resolvable:$true] %s174
          %180 = dma.hbm_to_vmem [thread:$0]  %s173, 1024, %s175, %s163, 128, 128, 8
        $region20: #{tpu_custom_call.1} parent=15 // pred_fallthru
          _
        // Predicated region
        $region21: #{tpu_custom_call.1} parent=15 // pred_check
          %p181 = pneg %p80
        $region22: #{tpu_custom_call.1} parent=15 // pred_check_branch
          %183 = sbr.rel (%p181) target = $region24
        $region23: #{tpu_custom_call.1} parent=15 // pred_region
          %s184 = sand.u32 %s18, 1
          %s185 = scalar_lea.sflag [#allocation6], %s184
          %s186 = sand.u32 %s70, 1
          %s187 = smul.addr %s186, 64
          %s188 = scalar_lea.vmem [#allocation5], %s187
          %s189 = sadd.s32 %s25, %s26
          %s190 = smul.u32 8, %s189
          %s192 = ssub.s32 1024, 1024
          %193 = vsyncadd %s185, %s192
          %s194 = smul.addr %s190, 128
          %s195 = scalar_lea.hbm %s1, %s194
          %s196 = sshll.u32 %s188, 4
          %s197 = int_to_ptr.vmem [resolvable:$true] %s196
          %202 = dma.hbm_to_vmem [thread:$0]  %s195, 1024, %s197, %s185, 128, 128, 8
        $region24: #{tpu_custom_call.1} parent=15 // pred_fallthru
          _
        // Predicated region
        $region25: #{tpu_custom_call.1} parent=15 // pred_check
          %p203 = pneg %p108
        $region26: #{tpu_custom_call.1} parent=15 // pred_check_branch
          %205 = sbr.rel (%p203) target = $region28
        $region27: #{tpu_custom_call.1} parent=15 // pred_region
          %s206 = sand.u32 %s18, 1
          %s207 = scalar_lea.sflag [#allocation6], %s206
          %s208 = sand.u32 %s98, 1
          %s209 = smul.addr %s208, 64
          %s210 = scalar_lea.vmem [#allocation7], %s209
          %s211 = sadd.s32 %s25, %s26
          %s212 = smul.u32 8, %s211
          %s214 = ssub.s32 1024, 1024
          %215 = vsyncadd %s207, %s214
          %s216 = smul.addr %s212, 128
          %s217 = scalar_lea.hbm %s2, %s216
          %s218 = sshll.u32 %s210, 4
          %s219 = int_to_ptr.vmem [resolvable:$true] %s218
          %224 = dma.hbm_to_vmem [thread:$0]  %s217, 1024, %s219, %s207, 128, 128, 8
        $region28: #{tpu_custom_call.1} parent=15 // pred_fallthru
          _
      $region16: #{tpu_custom_call.1} parent=5 // pred_fallthru
        _
      %p225 = scmp.le.s32.totalorder 1, %s18
      %p226 = scmp.lt.s32.totalorder %s18, 3
      %p227 = pnand %p225, %p226
      %p228 = pneg %p227
      // Predicated region
      $region29: #{tpu_custom_call.1} parent=5 // pred_check
        _
      $region30: #{tpu_custom_call.1} parent=5 // pred_check_branch
        %230 = sbr.rel (%p227) target = $region32
      $region31: #{tpu_custom_call.1} parent=5 // pred_region
        %s231 = ssub.s32 %s18, 1
        %s232 = sand.u32 %s45, 1
        %s233 = scalar_lea.sflag [#allocation3], %s232
        %s234 = sand.u32 %s45, 1
        %s235 = smul.addr %s234, 64
        %s236 = scalar_lea.vmem [#allocation2], %s235
        // Predicated region
        $region33: #{tpu_custom_call.1} parent=31 // pred_check
          %p237 = pneg %p58
        $region34: #{tpu_custom_call.1} parent=31 // pred_check_branch
          %239 = sbr.rel (%p237) target = $region36
        $region35: #{tpu_custom_call.1} parent=31 // pred_region
          %240 = dma.done %s233, 1024
        $region36: #{tpu_custom_call.1} parent=31 // pred_fallthru
          _
        %s241 = sand.u32 %s23, 1
        %s242 = scalar_lea.sflag [#allocation6], %s241
        %s243 = sand.u32 %s73, 1
        %s244 = smul.addr %s243, 64
        %s245 = scalar_lea.vmem [#allocation5], %s244
        // Predicated region
        $region37: #{tpu_custom_call.1} parent=31 // pred_check
          %p246 = pneg %p86
        $region38: #{tpu_custom_call.1} parent=31 // pred_check_branch
          %248 = sbr.rel (%p246) target = $region40
        $region39: #{tpu_custom_call.1} parent=31 // pred_region
          %249 = dma.done %s242, 1024
        $region40: #{tpu_custom_call.1} parent=31 // pred_fallthru
          _
        %s250 = sand.u32 %s23, 1
        %s251 = scalar_lea.sflag [#allocation6], %s250
        %s252 = sand.u32 %s101, 1
        %s253 = smul.addr %s252, 64
        %s254 = scalar_lea.vmem [#allocation7], %s253
        // Predicated region
        $region41: #{tpu_custom_call.1} parent=31 // pred_check
          %p255 = pneg %p114
        $region42: #{tpu_custom_call.1} parent=31 // pred_check_branch
          %257 = sbr.rel (%p255) target = $region44
        $region43: #{tpu_custom_call.1} parent=31 // pred_region
          %258 = dma.done %s251, 1024
        $region44: #{tpu_custom_call.1} parent=31 // pred_fallthru
          _
        %s259 = sand.u32 %s45, 1
        %s260 = scalar_lea.sflag [#allocation3], %s259
        %s261 = sand.u32 %s45, 1
        %s262 = smul.addr %s261, 64
        %s263 = scalar_lea.vmem [#allocation2], %s262
        %p264 = pneg %p58
        %p265 = pneg %p55
        %s266 = sand.u32 %s23, 1
        %s267 = scalar_lea.sflag [#allocation6], %s266
        %s268 = sand.u32 %s73, 1
        %s269 = smul.addr %s268, 64
        %s270 = scalar_lea.vmem [#allocation5], %s269
        %p271 = pneg %p86
        %p272 = pneg %p83
        %s273 = sand.u32 %s23, 1
        %s274 = scalar_lea.sflag [#allocation6], %s273
        %s275 = sand.u32 %s101, 1
        %s276 = smul.addr %s275, 64
        %s277 = scalar_lea.vmem [#allocation7], %s276
        %p278 = pneg %p114
        %p279 = pneg %p111
        %p280 = pneg %p140
        %p281 = pneg %p137
        %s282 = sand.u32 %s127, 1
        %s283 = scalar_lea.sflag [#allocation4], %s282
        %s284 = sand.u32 %s127, 1
        %s285 = smul.addr %s284, 8
        %s286 = scalar_lea.vmem [#allocation8], %s285
        %s287 = sadd.s32 %s27, %s28
        %s288 = smul.u32 8, %s287
        %s289 = sadd.s32 %s27, %s28
        %s290 = smul.u32 8, %s289
        %s291 = sadd.s32 %s27, %s28
        %s292 = smul.u32 8, %s291
        %p293 = scmp.eq.s32.totalorder %s28, 0
        // Predicated region
        $region45: #{tpu_custom_call.1} parent=31 // pred_check
          %p294 = pneg %p293
        $region46: #{tpu_custom_call.1} parent=31 // pred_check_branch
          %296 = sbr.rel (%p294) target = $region48
        $region47: #{tpu_custom_call.1} parent=31 // pred_region
          %297 = vst [vmem:[%s286] sm:$0xff] 0.0
        $region48: #{tpu_custom_call.1} parent=31 // pred_fallthru
          _
        %v298 = vld [vmem:[%s236] sm:$0xff]
        %v299 = vld [vmem:[%s236 + $0x8] sm:$0xff]
        %v300 = vld [vmem:[%s236 + $0x10] sm:$0xff]
        %v301 = vld [vmem:[%s236 + $0x18] sm:$0xff]
        %v302 = vld [vmem:[%s236 + $0x20] sm:$0xff]
        %v303 = vld [vmem:[%s236 + $0x28] sm:$0xff]
        %v304 = vld [vmem:[%s236 + $0x30] sm:$0xff]
        %v305 = vld [vmem:[%s236 + $0x38] sm:$0xff]
        %v306 = vld [vmem:[%s245] sm:$0xff]
        %v307 = vld [vmem:[%s245 + $0x8] sm:$0xff]
        %v308 = vld [vmem:[%s245 + $0x10] sm:$0xff]
        %v309 = vld [vmem:[%s245 + $0x18] sm:$0xff]
        %v310 = vld [vmem:[%s245 + $0x20] sm:$0xff]
        %v311 = vld [vmem:[%s245 + $0x28] sm:$0xff]
        %v312 = vld [vmem:[%s245 + $0x30] sm:$0xff]
        %v313 = vld [vmem:[%s245 + $0x38] sm:$0xff]
        %v314 = vld [vmem:[%s254] sm:$0xff]
        %v315 = vld [vmem:[%s254 + $0x8] sm:$0xff]
        %v316 = vld [vmem:[%s254 + $0x10] sm:$0xff]
        %v317 = vld [vmem:[%s254 + $0x18] sm:$0xff]
        %v318 = vld [vmem:[%s254 + $0x20] sm:$0xff]
        %v319 = vld [vmem:[%s254 + $0x28] sm:$0xff]
        %v320 = vld [vmem:[%s254 + $0x30] sm:$0xff]
        %v321 = vld [vmem:[%s254 + $0x38] sm:$0xff]
        %v322 = vand.u32 2147483647, %v298
        %v323 = vand.u32 2147483647, %v299
        %v324 = vand.u32 2147483647, %v300
        %v325 = vand.u32 2147483647, %v301
        %v326 = vand.u32 2147483647, %v302
        %v327 = vand.u32 2147483647, %v303
        %v328 = vand.u32 2147483647, %v304
        %v329 = vand.u32 2147483647, %v305
        %v330 = vsub.f32 0.0, %v322
        %v331 = vsub.f32 0.0, %v323
        %v332 = vsub.f32 0.0, %v324
        %v333 = vsub.f32 0.0, %v325
        %v334 = vsub.f32 0.0, %v326
        %v335 = vsub.f32 0.0, %v327
        %v336 = vsub.f32 0.0, %v328
        %v337 = vsub.f32 0.0, %v329
        %v338 = vmul.f32 %v330, 1.442695
        %v339 = vpow.pop %v338
        %v340 = vmul.f32 %v331, 1.442695
        %v341 = vpow.pop %v340
        %v342 = vmul.f32 %v332, 1.442695
        %v343 = vpow.pop %v342
        %v344 = vmul.f32 %v333, 1.442695
        %v345 = vpow.pop %v344
        %v346 = vmul.f32 %v334, 1.442695
        %v347 = vpow.pop %v346
        %v348 = vmul.f32 %v335, 1.442695
        %v349 = vpow.pop %v348
        %v350 = vmul.f32 %v336, 1.442695
        %v351 = vpow.pop %v350
        %v352 = vmul.f32 %v337, 1.442695
        %v353 = vpow.pop %v352
        %v354 = vadd.f32 %v339, 1.0
        %v355 = vadd.f32 %v341, 1.0
        %v356 = vadd.f32 %v343, 1.0
        %v357 = vadd.f32 %v345, 1.0
        %v358 = vadd.f32 %v347, 1.0
        %v359 = vadd.f32 %v349, 1.0
        %v360 = vadd.f32 %v351, 1.0
        %v361 = vadd.f32 %v353, 1.0
        %v362 = vrcp.pop %v354
        %v363 = vmul.f32 1.0, %v362
        %v364 = vrcp.pop %v355
        %v365 = vmul.f32 1.0, %v364
        %v366 = vrcp.pop %v356
        %v367 = vmul.f32 1.0, %v366
        %v368 = vrcp.pop %v357
        %v369 = vmul.f32 1.0, %v368
        %v370 = vrcp.pop %v358
        %v371 = vmul.f32 1.0, %v370
        %v372 = vrcp.pop %v359
        %v373 = vmul.f32 1.0, %v372
        %v374 = vrcp.pop %v360
        %v375 = vmul.f32 1.0, %v374
        %v376 = vrcp.pop %v361
        %v377 = vmul.f32 1.0, %v376
        %vm378 = vcmp.ge.f32.partialorder %v298, 0.0
        %vm379 = vcmp.ge.f32.partialorder %v299, 0.0
        %vm380 = vcmp.ge.f32.partialorder %v300, 0.0
        %vm381 = vcmp.ge.f32.partialorder %v301, 0.0
        %vm382 = vcmp.ge.f32.partialorder %v302, 0.0
        %vm383 = vcmp.ge.f32.partialorder %v303, 0.0
        %vm384 = vcmp.ge.f32.partialorder %v304, 0.0
        %vm385 = vcmp.ge.f32.partialorder %v305, 0.0
        %v386 = vsel %vm378, 1.0, %v339
        %v387 = vsel %vm379, 1.0, %v341
        %v388 = vsel %vm380, 1.0, %v343
        %v389 = vsel %vm381, 1.0, %v345
        %v390 = vsel %vm382, 1.0, %v347
        %v391 = vsel %vm383, 1.0, %v349
        %v392 = vsel %vm384, 1.0, %v351
        %v393 = vsel %vm385, 1.0, %v353
        %v394 = vmul.f32 %v386, %v363
        %v395 = vmul.f32 %v387, %v365
        %v396 = vmul.f32 %v388, %v367
        %v397 = vmul.f32 %v389, %v369
        %v398 = vmul.f32 %v390, %v371
        %v399 = vmul.f32 %v391, %v373
        %v400 = vmul.f32 %v392, %v375
        %v401 = vmul.f32 %v393, %v377
        %v402 = vmul.f32 %v394, %v394
        %v403 = vmul.f32 %v395, %v395
        %v404 = vmul.f32 %v396, %v396
        %v405 = vmul.f32 %v397, %v397
        %v406 = vmul.f32 %v398, %v398
        %v407 = vmul.f32 %v399, %v399
        %v408 = vmul.f32 %v400, %v400
        %v409 = vmul.f32 %v401, %v401
        %v410 = vmul.f32 %v402, 0.75
        %v411 = vmul.f32 %v403, 0.75
        %v412 = vmul.f32 %v404, 0.75
        %v413 = vmul.f32 %v405, 0.75
        %v414 = vmul.f32 %v406, 0.75
        %v415 = vmul.f32 %v407, 0.75
        %v416 = vmul.f32 %v408, 0.75
        %v417 = vmul.f32 %v409, 0.75
        %v418 = vsub.f32 1.0, %v314
        %v419 = vsub.f32 1.0, %v315
        %v420 = vsub.f32 1.0, %v316
        %v421 = vsub.f32 1.0, %v317
        %v422 = vsub.f32 1.0, %v318
        %v423 = vsub.f32 1.0, %v319
        %v424 = vsub.f32 1.0, %v320
        %v425 = vsub.f32 1.0, %v321
        %v426 = vmul.f32 %v410, %v418
        %v427 = vmul.f32 %v411, %v419
        %v428 = vmul.f32 %v412, %v420
        %v429 = vmul.f32 %v413, %v421
        %v430 = vmul.f32 %v414, %v422
        %v431 = vmul.f32 %v415, %v423
        %v432 = vmul.f32 %v416, %v424
        %v433 = vmul.f32 %v417, %v425
        %v434 = vmul.f32 %v306, %v314
        %v435 = vmul.f32 %v307, %v315
        %v436 = vmul.f32 %v308, %v316
        %v437 = vmul.f32 %v309, %v317
        %v438 = vmul.f32 %v310, %v318
        %v439 = vmul.f32 %v311, %v319
        %v440 = vmul.f32 %v312, %v320
        %v441 = vmul.f32 %v313, %v321
        %v442 = vadd.f32 %v426, %v434
        %v443 = vadd.f32 %v427, %v435
        %v444 = vadd.f32 %v428, %v436
        %v445 = vadd.f32 %v429, %v437
        %v446 = vadd.f32 %v430, %v438
        %v447 = vadd.f32 %v431, %v439
        %v448 = vadd.f32 %v432, %v440
        %v449 = vadd.f32 %v433, %v441
        %v450 = vmax.f32 %v298, 0.0
        %v451 = vmax.f32 %v299, 0.0
        %v452 = vmax.f32 %v300, 0.0
        %v453 = vmax.f32 %v301, 0.0
        %v454 = vmax.f32 %v302, 0.0
        %v455 = vmax.f32 %v303, 0.0
        %v456 = vmax.f32 %v304, 0.0
        %v457 = vmax.f32 %v305, 0.0
        %v458 = vmul.f32 %v298, %v306
        %v459 = vmul.f32 %v299, %v307
        %v460 = vmul.f32 %v300, %v308
        %v461 = vmul.f32 %v301, %v309
        %v462 = vmul.f32 %v302, %v310
        %v463 = vmul.f32 %v303, %v311
        %v464 = vmul.f32 %v304, %v312
        %v465 = vmul.f32 %v305, %v313
        %v466 = vsub.f32 %v450, %v458
        %v467 = vsub.f32 %v451, %v459
        %v468 = vsub.f32 %v452, %v460
        %v469 = vsub.f32 %v453, %v461
        %v470 = vsub.f32 %v454, %v462
        %v471 = vsub.f32 %v455, %v463
        %v472 = vsub.f32 %v456, %v464
        %v473 = vsub.f32 %v457, %v465
        %v474 = vadd.f32 %v339, 1.0
        %v475 = vlog2.pop %v474
        %v476 = vmul.f32 %v475, 0.6931472
        %v477 = vmul.f32 -0.5, %v339
        %v478 = vadd.f32 %v477, 1.0
        %v479 = vmul.f32 %v478, %v339
        %v480 = vand.u32 2147483647, %v339
        %vm481 = vcmp.lt.f32.partialorder %v480, 0.0004427343
        %v482 = vsel %vm481, %v479, %v476
        %v483 = vadd.f32 %v341, 1.0
        %v484 = vlog2.pop %v483
        %v485 = vmul.f32 %v484, 0.6931472
        %v486 = vmul.f32 -0.5, %v341
        %v487 = vadd.f32 %v486, 1.0
        %v488 = vmul.f32 %v487, %v341
        %v489 = vand.u32 2147483647, %v341
        %vm490 = vcmp.lt.f32.partialorder %v489, 0.0004427343
        %v491 = vsel %vm490, %v488, %v485
        %v492 = vadd.f32 %v343, 1.0
        %v493 = vlog2.pop %v492
        %v494 = vmul.f32 %v493, 0.6931472
        %v495 = vmul.f32 -0.5, %v343
        %v496 = vadd.f32 %v495, 1.0
        %v497 = vmul.f32 %v496, %v343
        %v498 = vand.u32 2147483647, %v343
        %vm499 = vcmp.lt.f32.partialorder %v498, 0.0004427343
        %v500 = vsel %vm499, %v497, %v494
        %v501 = vadd.f32 %v345, 1.0
        %v502 = vlog2.pop %v501
        %v503 = vmul.f32 %v502, 0.6931472
        %v504 = vmul.f32 -0.5, %v345
        %v505 = vadd.f32 %v504, 1.0
        %v506 = vmul.f32 %v505, %v345
        %v507 = vand.u32 2147483647, %v345
        %vm508 = vcmp.lt.f32.partialorder %v507, 0.0004427343
        %v509 = vsel %vm508, %v506, %v503
        %v510 = vadd.f32 %v347, 1.0
        %v511 = vlog2.pop %v510
        %v512 = vmul.f32 %v511, 0.6931472
        %v513 = vmul.f32 -0.5, %v347
        %v514 = vadd.f32 %v513, 1.0
        %v515 = vmul.f32 %v514, %v347
        %v516 = vand.u32 2147483647, %v347
        %vm517 = vcmp.lt.f32.partialorder %v516, 0.0004427343
        %v518 = vsel %vm517, %v515, %v512
        %v519 = vadd.f32 %v349, 1.0
        %v520 = vlog2.pop %v519
        %v521 = vmul.f32 %v520, 0.6931472
        %v522 = vmul.f32 -0.5, %v349
        %v523 = vadd.f32 %v522, 1.0
        %v524 = vmul.f32 %v523, %v349
        %v525 = vand.u32 2147483647, %v349
        %vm526 = vcmp.lt.f32.partialorder %v525, 0.0004427343
        %v527 = vsel %vm526, %v524, %v521
        %v528 = vadd.f32 %v351, 1.0
        %v529 = vlog2.pop %v528
        %v530 = vmul.f32 %v529, 0.6931472
        %v531 = vmul.f32 -0.5, %v351
        %v532 = vadd.f32 %v531, 1.0
        %v533 = vmul.f32 %v532, %v351
        %v534 = vand.u32 2147483647, %v351
        %vm535 = vcmp.lt.f32.partialorder %v534, 0.0004427343
        %v536 = vsel %vm535, %v533, %v530
        %v537 = vadd.f32 %v353, 1.0
        %v538 = vlog2.pop %v537
        %v539 = vmul.f32 %v538, 0.6931472
        %v540 = vmul.f32 -0.5, %v353
        %v541 = vadd.f32 %v540, 1.0
        %v542 = vmul.f32 %v541, %v353
        %v543 = vand.u32 2147483647, %v353
        %vm544 = vcmp.lt.f32.partialorder %v543, 0.0004427343
        %v545 = vsel %vm544, %v542, %v539
        %v546 = vadd.f32 %v466, %v482
        %v547 = vadd.f32 %v467, %v491
        %v548 = vadd.f32 %v468, %v500
        %v549 = vadd.f32 %v469, %v509
        %v550 = vadd.f32 %v470, %v518
        %v551 = vadd.f32 %v471, %v527
        %v552 = vadd.f32 %v472, %v536
        %v553 = vadd.f32 %v473, %v545
        %v554 = vmul.f32 %v546, %v442
        %v555 = vmul.f32 %v547, %v443
        %v556 = vmul.f32 %v548, %v444
        %v557 = vmul.f32 %v549, %v445
        %v558 = vmul.f32 %v550, %v446
        %v559 = vmul.f32 %v551, %v447
        %v560 = vmul.f32 %v552, %v448
        %v561 = vmul.f32 %v553, %v449
        %v562 = vld [vmem:[%s286] sm:$0xff]
        %v563 = vadd.f32 %v554, %v555
        %v564 = vadd.f32 %v563, %v556
        %v565 = vadd.f32 %v564, %v557
        %v566 = vadd.f32 %v565, %v558
        %v567 = vadd.f32 %v566, %v559
        %v568 = vadd.f32 %v567, %v560
        %v569 = vadd.f32 %v568, %v561
        %v570 = vadd.f32 %v562, %v569
        %571 = vst [vmem:[%s286] sm:$0xff] %v570
        %s572 = sand.u32 %s127, 1
        %s573 = scalar_lea.sflag [#allocation4], %s572
        %s574 = sand.u32 %s127, 1
        %s575 = smul.addr %s574, 8
        %s576 = scalar_lea.vmem [#allocation8], %s575
        // Predicated region
        $region49: #{tpu_custom_call.1} parent=31 // pred_check
          %p577 = pneg %p137
        $region50: #{tpu_custom_call.1} parent=31 // pred_check_branch
          %579 = sbr.rel (%p577) target = $region52
        $region51: #{tpu_custom_call.1} parent=31 // pred_region
          %s581 = ssub.s32 128, 128
          %582 = vsyncadd %s573, %s581
          %s583 = smul.addr %s27, 128
          %s584 = scalar_lea.hbm %s3, %s583
          %s586 = sshll.u32 %s576, 4
          %s587 = int_to_ptr.vmem [resolvable:$true] %s586
          %589 = dma.vmem_to_hbm [thread:$0]  %s587, 128, %s584, %s573
        $region52: #{tpu_custom_call.1} parent=31 // pred_fallthru
          _
      $region32: #{tpu_custom_call.1} parent=5 // pred_fallthru
        _
      %p590 = scmp.le.s32.totalorder 2, %s18
      // Predicated region
      $region53: #{tpu_custom_call.1} parent=5 // pred_check
        %p591 = pneg %p590
      $region54: #{tpu_custom_call.1} parent=5 // pred_check_branch
        %593 = sbr.rel (%p591) target = $region56
      $region55: #{tpu_custom_call.1} parent=5 // pred_region
        %s594 = ssub.s32 %s18, 2
        // Predicated region
        $region57: #{tpu_custom_call.1} parent=55 // pred_check
          %p595 = pneg %p143
        $region58: #{tpu_custom_call.1} parent=55 // pred_check_branch
          %597 = sbr.rel (%p595) target = $region60
        $region59: #{tpu_custom_call.1} parent=55 // pred_region
          %s598 = sand.u32 %s128, 1
          %s599 = scalar_lea.sflag [#allocation4], %s598
          %s600 = sand.u32 %s128, 1
          %s601 = smul.addr %s600, 8
          %s602 = scalar_lea.vmem [#allocation8], %s601
          %603 = dma.done %s599, 128
        $region60: #{tpu_custom_call.1} parent=55 // pred_fallthru
          _
      $region56: #{tpu_custom_call.1} parent=5 // pred_fallthru
        _
    $region6: #{tpu_custom_call.1} parent=1 // loop_footer
      %s22 = sadd.s32 1, %s18
    $region7: #{tpu_custom_call.1} parent=1 // loop_footer_branch
      %17 = sbr.rel target = $region3
    $region8: #{tpu_custom_call.1} parent=1 // loop_exit
      _
    %604 = vsyncpa [#allocation3], 1
    %s605 = scalar_lea.sflag [#allocation3], 1
    %606 = vsyncpa %s605, 1
    %607 = vsyncpa [#allocation6], 1
    %s608 = scalar_lea.sflag [#allocation6], 1
    %609 = vsyncpa %s608, 1
    %610 = vsyncpa [#allocation4], 1
    %s611 = scalar_lea.sflag [#allocation4], 1
    %612 = vsyncpa %s611, 1

</llo_original>
